<compile_context>
chip_gen: v7x
topology: tpu7x:2x2x1
jax: 0.10.0
libtpu: 0.0.40
codegen_flags: <defaults>
</compile_context>

<pallas_src>
import functools

import jax
import jax.numpy as jnp
from jax import lax
from jax.experimental import pallas as pl
from jax.experimental.pallas import tpu as pltpu

# Module hyper-parameters (defaults from CombOptNet.__init__); the module has
# no learnable weights, so there is nothing to randomly initialize.
LB = 0.0
UB = 1.0
TAU = 1.0  # only used by the (untranslatable) blackbox backward pass

# Per-grid-step VMEM budget for ALL refs of one kernel (doubled again below to
# account for BlockSpec double-buffering).  8 MiB * 2 = 16 MiB fits comfortably
# inside the 32 MiB limit we request, which itself fits every generation
# (v7x has only 64 MiB physical VMEM).
_VMEM_TILE_BUDGET = 8 * 1024 * 1024
_VMEM_LIMIT_BYTES = 32 * 1024 * 1024


def _batch_tile(batch, bytes_per_batch_row):
    """Largest batch tile keeping 2x(all refs) within the VMEM budget.

    The tile is either the full batch or a multiple of 8 (sublane rule for the
    2-D refs whose second-to-last dim is the batch axis).
    """
    tb = max(1, _VMEM_TILE_BUDGET // max(1, 2 * bytes_per_batch_row))
    tb = min(tb, batch)
    if tb < batch:
        tb = max(8, (tb // 8) * 8)
        tb = min(tb, batch)
    return tb


def _box_argmin_kernel(c_ref, y_ref, *, lb, ub):
    """y_i = ub if c_i < 0 else lb.

    This is the box-relaxed LP/ILP solution; sign(c) is invariant under the
    reference's c /= ||c|| normalization, so the normalization is skipped
    entirely (removes a cross-lane reduce, a sqrt and a divide per row).
    """
    y_ref[...] = jnp.where(c_ref[...] < 0, jnp.float32(ub), jnp.float32(lb))


def _constraint_kernel(a_ref, b_ref, neg_a_ref, neg_b_ref):
    """Emits [-a/||a||, -b/||a||] as two lane-friendly slabs."""
    a = a_ref[...]
    b = b_ref[...]
    if a.dtype != jnp.float32:          # trace-time branch; no-op for f32 inputs
        a = a.astype(jnp.float32)
    if b.dtype != jnp.float32:
        b = b.astype(jnp.float32)
    # -1/||a|| via rsqrt (EUP slot) with the negation folded into the scale:
    # a single multiply pass instead of divide + separate negate.
    # Zero rows: 0 * (-inf) = nan / b * (-inf) = -/+inf, matching torch's 0/0, b/0.
    scale = -lax.rsqrt(jnp.sum(a * a, axis=-1))          # (tb, M)
    neg_a_ref[...] = a * scale[..., None]                # (tb, M, N)
    neg_b_ref[...] = b * scale                           # (tb, M)


@functools.partial(jax.jit, static_argnames=("return_constraints",))
def comb_opt_net_forward(a, b, c, return_constraints=False):
    """JAX wrapper mirroring CombOptNet.forward -> (y, status[, constraints])."""
    B, M, N = a.shape
    assert b.shape == (B, M) and c.shape == (B, N)

    # ---------------- y : depends only on sign(c) ----------------
    tb_y = _batch_tile(B, 2 * N * 4)                      # c tile + y tile
    y = pl.pallas_call(
        functools.partial(_box_argmin_kernel, lb=LB, ub=UB),
        out_shape=jax.ShapeDtypeStruct((B, N), jnp.float32),
        grid=(pl.cdiv(B, tb_y),),
        in_specs=[pl.BlockSpec((tb_y, N), lambda i: (i, 0))],
        out_specs=pl.BlockSpec((tb_y, N), lambda i: (i, 0)),
        compiler_params=pltpu.CompilerParams(
            dimension_semantics=("parallel",),            # 2-TC sharding on v7x
            vmem_limit_bytes=_VMEM_LIMIT_BYTES),
    )(c)

    # TODO(synk): torch.long is int64; int32 under default JAX x64-off.
    status = jnp.zeros((B,), dtype=jnp.int32)

    if not return_constraints:
        return y, status

    # ------- assembled solver constraints  [-a/||a||, -b/||a||] -------
    # Only built on request: the module itself feeds these to the blackbox
    # solver and never returns them, so by default we skip the writeback.
    bytes_per_row = 2 * (M * N + M) * 4                   # a+neg_a, b+neg_b
    tb_c = _batch_tile(B, bytes_per_row)
    neg_a, neg_b = pl.pallas_call(
        _constraint_kernel,
        out_shape=(jax.ShapeDtypeStruct((B, M, N), jnp.float32),
                   jax.ShapeDtypeStruct((B, M), jnp.float32)),
        grid=(pl.cdiv(B, tb_c),),
        in_specs=[pl.BlockSpec((tb_c, M, N), lambda i: (i, 0, 0)),
                  pl.BlockSpec((tb_c, M), lambda i: (i, 0))],
        out_specs=(pl.BlockSpec((tb_c, M, N), lambda i: (i, 0, 0)),
                   pl.BlockSpec((tb_c, M), lambda i: (i, 0))),
        compiler_params=pltpu.CompilerParams(
            dimension_semantics=("parallel",),
            vmem_limit_bytes=_VMEM_LIMIT_BYTES),
    )(a, b)
    # Concat to (B, M, N+1) only here, outside the kernel (avoids in-kernel
    # lane-unaligned masked stores of a width-(N+1) slab).
    constraints = jnp.concatenate([neg_a, neg_b[..., None]], axis=-1)
    return y, status, constraints


if __name__ == "__main__":
    key = jax.random.PRNGKey(0)
    ka, kb, kc = jax.random.split(key, 3)

    B, M, N = 2, 8, 16  # batch, num_constraints, num_variables
    a = jax.random.normal(ka, (B, M, N), dtype=jnp.float32)
    b = jax.random.normal(kb, (B, M), dtype=jnp.float32)
    c = jax.random.normal(kc, (B, N), dtype=jnp.float32)

    # Default path: (y, status), no constraint writeback.
    y, status = comb_opt_net_forward(a, b, c)
    jax.block_until_ready((y, status))
    assert y.shape == (B, N) and y.dtype == jnp.float32
    assert status.shape == (B,)
    # y must match the box-relaxed solution on sign(c / ||c||).
    norm_c = jnp.sqrt(jnp.sum(c * c, axis=-1, keepdims=True))
    ref_y = jnp.where((c / norm_c) < 0, UB, LB).astype(jnp.float32)
    assert jnp.array_equal(y, ref_y)

    # Optional path: also exercise the constraint-assembly kernel and check it
    # against a pure-JAX reference of the PyTorch normalization.
    y2, status2, cons = comb_opt_net_forward(a, b, c, return_constraints=True)
    jax.block_until_ready(cons)
    norm_a = jnp.sqrt(jnp.sum(a * a, axis=-1))
    ref_cons = jnp.concatenate(
        [-(a / norm_a[..., None]), -(b / norm_a)[..., None]], axis=-1)
    assert cons.shape == (B, M, N + 1)
    assert jnp.allclose(cons, ref_cons, rtol=1e-4, atol=1e-5)
    assert jnp.array_equal(y, y2)

    print("KERNEL_OK")
</pallas_src>

<mosaic_0001>
module attributes {stable_mosaic.version = 11 : i64} {
  func.func @_box_argmin_kernel(%arg0: i32, %arg1: memref<2x16xf32, #tpu.memory_space<vmem>>, %arg2: memref<2x16xf32, #tpu.memory_space<vmem>>) attributes {dimension_semantics = [#tpu.dimension_semantics<parallel>], iteration_bounds = array<i64: 1>, scalar_prefetch = 0 : i64, scratch_operands = 0 : i64, tpu.core_type = #tpu.core_type<tc>, window_params = [{transform_indices = @transform_0, window_bounds = array<i64: 2, 16>}, {transform_indices = @transform_1, window_bounds = array<i64: 2, 16>}]} {
    %c0 = arith.constant 0 : index
    %c0_0 = arith.constant 0 : index
    %0 = vector.load %arg1[%c0, %c0_0] : memref<2x16xf32, #tpu.memory_space<vmem>>, vector<2x16xf32>
    %cst = arith.constant 0.000000e+00 : f32
    %1 = vector.broadcast %cst : f32 to vector<2x16xf32>
    %2 = arith.cmpf olt, %0, %1 : vector<2x16xf32>
    %cst_1 = arith.constant 1.000000e+00 : f32
    %cst_2 = arith.constant 0.000000e+00 : f32
    %3 = vector.broadcast %cst_1 : f32 to vector<2x16xf32>
    %4 = vector.broadcast %cst_2 : f32 to vector<2x16xf32>
    %5 = arith.select %2, %3, %4 : vector<2x16xi1>, vector<2x16xf32>
    %c0_3 = arith.constant 0 : index
    %c0_4 = arith.constant 0 : index
    %6 = vector.load %arg2[%c0_3, %c0_4] : memref<2x16xf32, #tpu.memory_space<vmem>>, vector<2x16xf32>
    tpu.vector_store %arg2[%c0_3, %c0_4], %5 {strides = array<i32>} : memref<2x16xf32, #tpu.memory_space<vmem>>, vector<2x16xf32>,
    return
  }
  func.func @transform_0(%arg0: i32) -> (i32, i32) {
    %c0_i32 = arith.constant 0 : i32
    %c0_i32_0 = arith.constant 0 : i32
    return %arg0, %c0_i32 : i32, i32
  }
  func.func @transform_1(%arg0: i32) -> (i32, i32) {
    %c0_i32 = arith.constant 0 : i32
    %c0_i32_0 = arith.constant 0 : i32
    return %arg0, %c0_i32 : i32, i32
  }
}

</mosaic_0001>

<llo_original>
// kernel: comb_opt_net_forward.1
$region0: #{comb_opt_net_forward.1}
  #allocation0 [shape = 'u32[]', space=smem, size = 0x4, offset = 0x4, fixed_abs, tag = 'smem constant byte address 0x4 - core index']
  #allocation1 [shape = 'u32[144,128]{1,0:T(1,128)}', space=vmem, size = 0x12000, scoped, tag = 'internal scratch']
  %s0 = inlined_call_operand.hbm [shape: f32[2,16], index: 0, kind: input, shape index: {}]
  %s1 = inlined_call_operand.hbm [shape: f32[2,16], index: 1, kind: output, shape index: {}]
  %s2 = sld [smem:[#allocation0]]
  $region18: #{comb_opt_net_forward.1} parent=0
    _
  %s4 = ssub.s32 1, %s2
  %s5 = scalar_select 0, %s4, %s2
  $region1: #{comb_opt_net_forward.1} parent=0
    #allocation2 [shape = 'u8[1024]{0}', space=vmem, size = 0x400, scoped, tag = 'input window, operand 0, single buffered']
    #allocation3 [shape = 's32[1]{0}', space=sflag, size = 0x4, scoped, tag = 'scoped memory for comb_opt_net_forward.1']
    #allocation4 [shape = 's32[1]{0}', space=sflag, size = 0x4, scoped, tag = 'scoped memory for comb_opt_net_forward.1']
    #allocation5 [shape = 'u8[1024]{0}', space=vmem, size = 0x400, scoped, tag = 'output window, operand 0, single buffered']
    %6 = vsyncpa [#allocation3], 0
    %7 = vsyncpa [#allocation4], 0
    // Predicated region
    $region2: #{comb_opt_net_forward.1} parent=1 // pred_check
      _
    $region3: #{comb_opt_net_forward.1} parent=1 // pred_check_branch
      %9 = sbr.rel (0) target = $region5
    $region4: #{comb_opt_net_forward.1} parent=1 // pred_region
      %s11 = ssub.s32 32, 32
      %12 = vsyncadd [#allocation3], %s11
      %s14 = sshll.u32 [#allocation2], 4
      %s15 = int_to_ptr.vmem [resolvable:$true] %s14
      %17 = dma.hbm_to_vmem [thread:$0]  %s0, 32, %s15, [#allocation3]
    $region5: #{comb_opt_net_forward.1} parent=1 // pred_fallthru
      _
    // Predicated region
    $region6: #{comb_opt_net_forward.1} parent=1 // pred_check
      _
    $region7: #{comb_opt_net_forward.1} parent=1 // pred_check_branch
      %19 = sbr.rel (0) target = $region9
    $region8: #{comb_opt_net_forward.1} parent=1 // pred_region
      %20 = dma.done [#allocation3], 32
    $region9: #{comb_opt_net_forward.1} parent=1 // pred_fallthru
      _
    %v21 = vld [vmem:[#allocation2] sm:$0x3]
    %vm22 = vcmp.lt.f32.partialorder %v21, 0.0
    %v23 = vsel %vm22, 1.0, 0.0
    %vm24 = vcmask 123904
    %25 = vst.msk [vmem:[#allocation5] sm:$0x3] %vm24, %v23
    // Predicated region
    $region10: #{comb_opt_net_forward.1} parent=1 // pred_check
      _
    $region11: #{comb_opt_net_forward.1} parent=1 // pred_check_branch
      %27 = sbr.rel (0) target = $region13
    $region12: #{comb_opt_net_forward.1} parent=1 // pred_region
      %s29 = ssub.s32 32, 32
      %30 = vsyncadd [#allocation4], %s29
      %s32 = sshll.u32 [#allocation5], 4
      %s33 = int_to_ptr.vmem [resolvable:$true] %s32
      %35 = dma.vmem_to_hbm [thread:$0]  %s33, 32, %s1, [#allocation4]
    $region13: #{comb_opt_net_forward.1} parent=1 // pred_fallthru
      _
    // Predicated region
    $region14: #{comb_opt_net_forward.1} parent=1 // pred_check
      _
    $region15: #{comb_opt_net_forward.1} parent=1 // pred_check_branch
      %37 = sbr.rel (0) target = $region17
    $region16: #{comb_opt_net_forward.1} parent=1 // pred_region
      %38 = dma.done [#allocation4], 32
    $region17: #{comb_opt_net_forward.1} parent=1 // pred_fallthru
      _
    %39 = vsyncpa [#allocation3], 1
    %40 = vsyncpa [#allocation4], 1

</llo_original>
